<compile_context>
chip_gen: v7x
topology: tpu7x:2x2x1
jax: 0.10.0
libtpu: 0.0.40
codegen_flags: <defaults>
</compile_context>

<pallas_src>
import jax
import jax.numpy as jnp
from jax import lax
from jax.experimental import pallas as pl
from jax.experimental.pallas import tpu as pltpu

_K = 5           # Conv1d kernel size
_PAD = _K // 2   # 'same' padding


def _make_kernel(Bb, C, T, use_mxu):
    """Build the fused SEBlock kernel for a (Bb, C, T) block."""

    def kernel(x_ref, wcols_ref, w1t_ref, b1r_ref, w2_ref, b2c_ref, o_ref, xs_ref):
        # x_ref    : (Bb, C, T)       unpadded input, native dtype
        # wcols_ref: (C, K*C)         conv weight; column k*C+ci = w[:, ci, k]
        # w1t_ref  : (C, H)           linear1.weight^T
        # b1r_ref  : (1, H)           linear1.bias as a row
        # w2_ref   : (C, H)           linear2.weight (PyTorch layout)
        # b2c_ref  : (C, 1)           linear2.bias as a column
        # o_ref    : (Bb, C, T)
        # xs_ref   : (Bb, C, T+2*PAD) f32 scratch: zero-edged padded copy of x

        # ---- Build the padded f32 working copy in VMEM (no HBM pad copy) ----
        edge = jnp.zeros((Bb, C, _PAD), jnp.float32)
        xs_ref[:, :, pl.ds(0, _PAD)] = edge
        xs_ref[:, :, pl.ds(_PAD + T, _PAD)] = edge
        xs_ref[:, :, pl.ds(_PAD, T)] = x_ref[...].astype(jnp.float32)

        for b in range(Bb):
            # ---- Conv1d (kernel 5, 'same', no bias) --------------------------
            conv = jnp.zeros((C, T), jnp.float32)
            if use_mxu:
                # Large C: shifted (C,C)@(C,T) MXU matmuls, bf16 operands,
                # f32 accumulation.  (bf16 cast trades a little precision for
                # 2-4x MXU throughput; epilogue below stays f32.)
                for k in range(_K):
                    wtap = wcols_ref[:, pl.ds(k * C, C)]                  # (C, C)
                    xk = xs_ref[b, :, pl.ds(k, T)].astype(wtap.dtype)     # (C, T)
                    conv = conv + jnp.dot(wtap, xk,
                                          preferred_element_type=jnp.float32)
            else:
                # Small C: the MXU would be ~99% idle, so do K*C broadcast-FMAs
                # on the VPU.  Weight columns and shifted input rows are read
                # straight from the refs (no in-register relayouts).
                for k in range(_K):
                    for ci in range(C):
                        col = wcols_ref[:, pl.ds(k * C + ci, 1)]          # (C, 1)
                        row = xs_ref[b, pl.ds(ci, 1), pl.ds(k, T)]        # (1, T)
                        conv = conv + col * row

            # ---- Squeeze: per-channel temporal mean --------------------------
            mean_c = jnp.mean(conv, axis=-1, keepdims=True)               # (C, 1)

            # ---- Excitation MLP (tiny -> matmul-free, all f32) ---------------
            # z1[h] = sum_c W1[h,c]*mean[c]  (broadcast over lanes, sublane sum)
            z1 = jnp.sum(w1t_ref[...] * mean_c, axis=0, keepdims=True) + b1r_ref[...]
            z1 = jnp.maximum(z1, 0.0)                                      # (1, H)
            # z2[c] = sum_h W2[c,h]*z1[h]    (broadcast over sublanes, lane sum)
            z2 = jnp.sum(w2_ref[...] * z1, axis=1, keepdims=True) + b2c_ref[...]
            gate = jax.nn.sigmoid(z2)                                      # (C, 1)

            # ---- Scale + residual --------------------------------------------
            xb = x_ref[b].astype(jnp.float32)                              # (C, T)
            o_ref[b] = (xb + conv * gate).astype(o_ref.dtype)

    return kernel


def _pick_block_batch(B):
    """Largest divisor of B (<=8) that still leaves >=2 grid steps (megacore)."""
    for bb in (8, 4, 2, 1):
        if B % bb == 0 and B // bb >= 2:
            return bb
    for bb in (8, 4, 2, 1):
        if B % bb == 0:
            return bb
    return 1


def se_block(x, w_conv, w1, b1, w2, b2):
    """SEBlock forward.

    x      : (B, C, T)
    w_conv : (C, C, K)   PyTorch Conv1d weight layout (out, in, k)
    w1     : (H, C)      linear1.weight,  b1 : (H,)
    w2     : (C, H)      linear2.weight,  b2 : (C,)
    """
    B, C, T = x.shape
    H = w1.shape[0]
    assert w_conv.shape == (C, C, _K)
    assert w1.shape == (H, C) and b1.shape == (H,)
    assert w2.shape == (C, H) and b2.shape == (C,)

    Bb = _pick_block_batch(B)
    use_mxu = C >= 128

    # Conv weight as (C_out, K*C_in): a width-C lane slice recovers tap k for the
    # MXU path, a width-1 slice gives a ready-made broadcast column for the
    # small-C VPU path.  Only MXU operands are downcast; everything else is f32.
    conv_dtype = jnp.bfloat16 if use_mxu else jnp.float32
    wcols = jnp.transpose(w_conv, (0, 2, 1)).reshape(C, _K * C).astype(conv_dtype)
    w1t = jnp.transpose(w1, (1, 0)).astype(jnp.float32)       # (C, H)
    b1r = b1.reshape(1, H).astype(jnp.float32)                 # (1, H)
    w2f = w2.astype(jnp.float32)                               # (C, H)
    b2c = b2.reshape(C, 1).astype(jnp.float32)                 # (C, 1)

    Tp = T + 2 * _PAD
    itemsize = jnp.dtype(x.dtype).itemsize
    # Rough VMEM budget: double-buffered x/out blocks + padded scratch + weights.
    est = (2 * Bb * C * T * itemsize                       # x blocks (x2 buf)
           + 2 * Bb * C * T * itemsize                     # out blocks (x2 buf)
           + Bb * C * Tp * 4                               # padded f32 scratch
           + 2 * (wcols.size * wcols.dtype.itemsize
                  + (w1t.size + b1r.size + w2f.size + b2c.size) * 4)
           + (1 << 20))
    vmem_limit = int(min(max(est, 32 << 20), 48 << 20))

    kernel = _make_kernel(Bb, C, T, use_mxu)

    return pl.pallas_call(
        kernel,
        out_shape=jax.ShapeDtypeStruct((B, C, T), x.dtype),
        grid=(B // Bb,),
        in_specs=[
            pl.BlockSpec((Bb, C, T), lambda n: (n, 0, 0)),     # x (unpadded)
            pl.BlockSpec((C, _K * C), lambda n: (0, 0)),       # conv weight cols
            pl.BlockSpec((C, H), lambda n: (0, 0)),            # W1^T
            pl.BlockSpec((1, H), lambda n: (0, 0)),            # b1 row
            pl.BlockSpec((C, H), lambda n: (0, 0)),            # W2
            pl.BlockSpec((C, 1), lambda n: (0, 0)),            # b2 column
        ],
        out_specs=pl.BlockSpec((Bb, C, T), lambda n: (n, 0, 0)),
        scratch_shapes=[pltpu.VMEM((Bb, C, Tp), jnp.float32)],
        compiler_params=pltpu.CompilerParams(
            dimension_semantics=("parallel",),
            vmem_limit_bytes=vmem_limit,
        ),
    )(x, wcols, w1t, b1r, w2f, b2c)


# ---------------------------------------------------------------------------
# Pure-JAX reference for correctness checking (forced to full f32 precision).
# ---------------------------------------------------------------------------
def _reference(x, w_conv, w1, b1, w2, b2):
    conv = lax.conv_general_dilated(
        x, w_conv, window_strides=(1,), padding=[(_PAD, _PAD)],
        dimension_numbers=("NCH", "OIH", "NCH"),
        precision=lax.Precision.HIGHEST)
    mean = conv.mean(axis=2)                                           # (B, C)
    z = jax.nn.relu(jnp.dot(mean, w1.T, precision=lax.Precision.HIGHEST) + b1)
    z = jax.nn.sigmoid(jnp.dot(z, w2.T, precision=lax.Precision.HIGHEST) + b2)
    return x + conv * z[:, :, None]


if __name__ == "__main__":
    # Small shapes consistent with the module; T=128 keeps stores lane-dense.
    B, C, T = 2, 4, 128
    HID = 32

    key = jax.random.PRNGKey(0)
    kx, kw, k1, k2, k3, k4 = jax.random.split(key, 6)

    x = jax.random.normal(kx, (B, C, T), dtype=jnp.float32)

    # PyTorch-style uniform(-1/sqrt(fan_in), 1/sqrt(fan_in)) initialisation.
    bc = 1.0 / (C * _K) ** 0.5
    w_conv = jax.random.uniform(kw, (C, C, _K), jnp.float32, -bc, bc)
    bl1 = 1.0 / C ** 0.5
    w1 = jax.random.uniform(k1, (HID, C), jnp.float32, -bl1, bl1)
    b1 = jax.random.uniform(k2, (HID,), jnp.float32, -bl1, bl1)
    bl2 = 1.0 / HID ** 0.5
    w2 = jax.random.uniform(k3, (C, HID), jnp.float32, -bl2, bl2)
    b2 = jax.random.uniform(k4, (C,), jnp.float32, -bl2, bl2)

    out = se_block(x, w_conv, w1, b1, w2, b2)
    jax.block_until_ready(out)

    ref = _reference(x, w_conv, w1, b1, w2, b2)
    assert out.shape == (B, C, T)
    assert jnp.allclose(out, ref, atol=1e-4, rtol=1e-4), "mismatch vs reference"

    print("KERNEL_OK")
</pallas_src>

<mosaic_0001>
module attributes {stable_mosaic.version = 11 : i64} {
  func.func @kernel(%arg0: i32, %arg1: memref<1x4x128xf32, #tpu.memory_space<vmem>>, %arg2: memref<4x20xf32, #tpu.memory_space<vmem>>, %arg3: memref<4x32xf32, #tpu.memory_space<vmem>>, %arg4: memref<1x32xf32, #tpu.memory_space<vmem>>, %arg5: memref<4x32xf32, #tpu.memory_space<vmem>>, %arg6: memref<4x1xf32, #tpu.memory_space<vmem>>, %arg7: memref<1x4x128xf32, #tpu.memory_space<vmem>>, %arg8: memref<1x4x132xf32, #tpu.memory_space<vmem>>) attributes {dimension_semantics = [#tpu.dimension_semantics<parallel>], iteration_bounds = array<i64: 2>, scalar_prefetch = 0 : i64, scratch_operands = 1 : i64, tpu.core_type = #tpu.core_type<tc>, window_params = [{transform_indices = @transform_0, window_bounds = array<i64: 1, 4, 128>}, {pipeline_mode = #tpu.pipeline_mode<synchronous>, transform_indices = @transform_1, window_bounds = array<i64: 4, 20>}, {pipeline_mode = #tpu.pipeline_mode<synchronous>, transform_indices = @transform_2, window_bounds = array<i64: 4, 32>}, {pipeline_mode = #tpu.pipeline_mode<synchronous>, transform_indices = @transform_3, window_bounds = array<i64: 1, 32>}, {pipeline_mode = #tpu.pipeline_mode<synchronous>, transform_indices = @transform_4, window_bounds = array<i64: 4, 32>}, {pipeline_mode = #tpu.pipeline_mode<synchronous>, transform_indices = @transform_5, window_bounds = array<i64: 4, 1>}, {transform_indices = @transform_6, window_bounds = array<i64: 1, 4, 128>}]} {
    %cst = arith.constant 0.000000e+00 : f32
    %0 = vector.broadcast %cst : f32 to vector<1x4x2xf32>
    %c0 = arith.constant 0 : index
    %c0_0 = arith.constant 0 : index
    %c0_1 = arith.constant 0 : index
    %1 = vector.load %arg8[%c0, %c0_0, %c0_1] : memref<1x4x132xf32, #tpu.memory_space<vmem>>, vector<1x4x2xf32>
    tpu.vector_store %arg8[%c0, %c0_0, %c0_1], %0 {strides = array<i32>} : memref<1x4x132xf32, #tpu.memory_space<vmem>>, vector<1x4x2xf32>,
    %c0_2 = arith.constant 0 : index
    %c0_3 = arith.constant 0 : index
    %c130 = arith.constant 130 : index
    %2 = vector.load %arg8[%c0_2, %c0_3, %c130] : memref<1x4x132xf32, #tpu.memory_space<vmem>>, vector<1x4x2xf32>
    tpu.vector_store %arg8[%c0_2, %c0_3, %c130], %0 {strides = array<i32>} : memref<1x4x132xf32, #tpu.memory_space<vmem>>, vector<1x4x2xf32>,
    %c0_4 = arith.constant 0 : index
    %c0_5 = arith.constant 0 : index
    %c0_6 = arith.constant 0 : index
    %3 = vector.load %arg1[%c0_4, %c0_5, %c0_6] : memref<1x4x128xf32, #tpu.memory_space<vmem>>, vector<1x4x128xf32>
    %c0_7 = arith.constant 0 : index
    %c0_8 = arith.constant 0 : index
    %c2 = arith.constant 2 : index
    %4 = vector.load %arg8[%c0_7, %c0_8, %c2] : memref<1x4x132xf32, #tpu.memory_space<vmem>>, vector<1x4x128xf32>
    tpu.vector_store %arg8[%c0_7, %c0_8, %c2], %3 {strides = array<i32>} : memref<1x4x132xf32, #tpu.memory_space<vmem>>, vector<1x4x128xf32>,
    %cst_9 = arith.constant 0.000000e+00 : f32
    %5 = vector.broadcast %cst_9 : f32 to vector<4x128xf32>
    %c0_10 = arith.constant 0 : index
    %c0_11 = arith.constant 0 : index
    %6 = vector.load %arg2[%c0_10, %c0_11] : memref<4x20xf32, #tpu.memory_space<vmem>>, vector<4x1xf32>
    %c0_12 = arith.constant 0 : index
    %c0_13 = arith.constant 0 : index
    %c0_14 = arith.constant 0 : index
    %7 = vector.load %arg8[%c0_12, %c0_13, %c0_14] : memref<1x4x132xf32, #tpu.memory_space<vmem>>, vector<1x1x128xf32>
    %8 = vector.shape_cast %7 : vector<1x1x128xf32> to vector<1x128xf32>
    %9 = vector.broadcast %6 : vector<4x1xf32> to vector<4x128xf32>
    %10 = vector.broadcast %8 : vector<1x128xf32> to vector<4x128xf32>
    %11 = arith.mulf %9, %10 : vector<4x128xf32>
    %12 = arith.addf %5, %11 : vector<4x128xf32>
    %c0_15 = arith.constant 0 : index
    %c1 = arith.constant 1 : index
    %13 = vector.load %arg2[%c0_15, %c1] : memref<4x20xf32, #tpu.memory_space<vmem>>, vector<4x1xf32>
    %c0_16 = arith.constant 0 : index
    %c1_17 = arith.constant 1 : index
    %c0_18 = arith.constant 0 : index
    %14 = vector.load %arg8[%c0_16, %c1_17, %c0_18] : memref<1x4x132xf32, #tpu.memory_space<vmem>>, vector<1x1x128xf32>
    %15 = vector.shape_cast %14 : vector<1x1x128xf32> to vector<1x128xf32>
    %16 = vector.broadcast %13 : vector<4x1xf32> to vector<4x128xf32>
    %17 = vector.broadcast %15 : vector<1x128xf32> to vector<4x128xf32>
    %18 = arith.mulf %16, %17 : vector<4x128xf32>
    %19 = arith.addf %12, %18 : vector<4x128xf32>
    %c0_19 = arith.constant 0 : index
    %c2_20 = arith.constant 2 : index
    %20 = vector.load %arg2[%c0_19, %c2_20] : memref<4x20xf32, #tpu.memory_space<vmem>>, vector<4x1xf32>
    %c0_21 = arith.constant 0 : index
    %c2_22 = arith.constant 2 : index
    %c0_23 = arith.constant 0 : index
    %21 = vector.load %arg8[%c0_21, %c2_22, %c0_23] : memref<1x4x132xf32, #tpu.memory_space<vmem>>, vector<1x1x128xf32>
    %22 = vector.shape_cast %21 : vector<1x1x128xf32> to vector<1x128xf32>
    %23 = vector.broadcast %20 : vector<4x1xf32> to vector<4x128xf32>
    %24 = vector.broadcast %22 : vector<1x128xf32> to vector<4x128xf32>
    %25 = arith.mulf %23, %24 : vector<4x128xf32>
    %26 = arith.addf %19, %25 : vector<4x128xf32>
    %c0_24 = arith.constant 0 : index
    %c3 = arith.constant 3 : index
    %27 = vector.load %arg2[%c0_24, %c3] : memref<4x20xf32, #tpu.memory_space<vmem>>, vector<4x1xf32>
    %c0_25 = arith.constant 0 : index
    %c3_26 = arith.constant 3 : index
    %c0_27 = arith.constant 0 : index
    %28 = vector.load %arg8[%c0_25, %c3_26, %c0_27] : memref<1x4x132xf32, #tpu.memory_space<vmem>>, vector<1x1x128xf32>
    %29 = vector.shape_cast %28 : vector<1x1x128xf32> to vector<1x128xf32>
    %30 = vector.broadcast %27 : vector<4x1xf32> to vector<4x128xf32>
    %31 = vector.broadcast %29 : vector<1x128xf32> to vector<4x128xf32>
    %32 = arith.mulf %30, %31 : vector<4x128xf32>
    %33 = arith.addf %26, %32 : vector<4x128xf32>
    %c0_28 = arith.constant 0 : index
    %c4 = arith.constant 4 : index
    %34 = vector.load %arg2[%c0_28, %c4] : memref<4x20xf32, #tpu.memory_space<vmem>>, vector<4x1xf32>
    %c0_29 = arith.constant 0 : index
    %c0_30 = arith.constant 0 : index
    %c1_31 = arith.constant 1 : index
    %35 = vector.load %arg8[%c0_29, %c0_30, %c1_31] : memref<1x4x132xf32, #tpu.memory_space<vmem>>, vector<1x1x128xf32>
    %36 = vector.shape_cast %35 : vector<1x1x128xf32> to vector<1x128xf32>
    %37 = vector.broadcast %34 : vector<4x1xf32> to vector<4x128xf32>
    %38 = vector.broadcast %36 : vector<1x128xf32> to vector<4x128xf32>
    %39 = arith.mulf %37, %38 : vector<4x128xf32>
    %40 = arith.addf %33, %39 : vector<4x128xf32>
    %c0_32 = arith.constant 0 : index
    %c5 = arith.constant 5 : index
    %41 = vector.load %arg2[%c0_32, %c5] : memref<4x20xf32, #tpu.memory_space<vmem>>, vector<4x1xf32>
    %c0_33 = arith.constant 0 : index
    %c1_34 = arith.constant 1 : index
    %c1_35 = arith.constant 1 : index
    %42 = vector.load %arg8[%c0_33, %c1_34, %c1_35] : memref<1x4x132xf32, #tpu.memory_space<vmem>>, vector<1x1x128xf32>
    %43 = vector.shape_cast %42 : vector<1x1x128xf32> to vector<1x128xf32>
    %44 = vector.broadcast %41 : vector<4x1xf32> to vector<4x128xf32>
    %45 = vector.broadcast %43 : vector<1x128xf32> to vector<4x128xf32>
    %46 = arith.mulf %44, %45 : vector<4x128xf32>
    %47 = arith.addf %40, %46 : vector<4x128xf32>
    %c0_36 = arith.constant 0 : index
    %c6 = arith.constant 6 : index
    %48 = vector.load %arg2[%c0_36, %c6] : memref<4x20xf32, #tpu.memory_space<vmem>>, vector<4x1xf32>
    %c0_37 = arith.constant 0 : index
    %c2_38 = arith.constant 2 : index
    %c1_39 = arith.constant 1 : index
    %49 = vector.load %arg8[%c0_37, %c2_38, %c1_39] : memref<1x4x132xf32, #tpu.memory_space<vmem>>, vector<1x1x128xf32>
    %50 = vector.shape_cast %49 : vector<1x1x128xf32> to vector<1x128xf32>
    %51 = vector.broadcast %48 : vector<4x1xf32> to vector<4x128xf32>
    %52 = vector.broadcast %50 : vector<1x128xf32> to vector<4x128xf32>
    %53 = arith.mulf %51, %52 : vector<4x128xf32>
    %54 = arith.addf %47, %53 : vector<4x128xf32>
    %c0_40 = arith.constant 0 : index
    %c7 = arith.constant 7 : index
    %55 = vector.load %arg2[%c0_40, %c7] : memref<4x20xf32, #tpu.memory_space<vmem>>, vector<4x1xf32>
    %c0_41 = arith.constant 0 : index
    %c3_42 = arith.constant 3 : index
    %c1_43 = arith.constant 1 : index
    %56 = vector.load %arg8[%c0_41, %c3_42, %c1_43] : memref<1x4x132xf32, #tpu.memory_space<vmem>>, vector<1x1x128xf32>
    %57 = vector.shape_cast %56 : vector<1x1x128xf32> to vector<1x128xf32>
    %58 = vector.broadcast %55 : vector<4x1xf32> to vector<4x128xf32>
    %59 = vector.broadcast %57 : vector<1x128xf32> to vector<4x128xf32>
    %60 = arith.mulf %58, %59 : vector<4x128xf32>
    %61 = arith.addf %54, %60 : vector<4x128xf32>
    %c0_44 = arith.constant 0 : index
    %c8 = arith.constant 8 : index
    %62 = vector.load %arg2[%c0_44, %c8] : memref<4x20xf32, #tpu.memory_space<vmem>>, vector<4x1xf32>
    %c0_45 = arith.constant 0 : index
    %c0_46 = arith.constant 0 : index
    %c2_47 = arith.constant 2 : index
    %63 = vector.load %arg8[%c0_45, %c0_46, %c2_47] : memref<1x4x132xf32, #tpu.memory_space<vmem>>, vector<1x1x128xf32>
    %64 = vector.shape_cast %63 : vector<1x1x128xf32> to vector<1x128xf32>
    %65 = vector.broadcast %62 : vector<4x1xf32> to vector<4x128xf32>
    %66 = vector.broadcast %64 : vector<1x128xf32> to vector<4x128xf32>
    %67 = arith.mulf %65, %66 : vector<4x128xf32>
    %68 = arith.addf %61, %67 : vector<4x128xf32>
    %c0_48 = arith.constant 0 : index
    %c9 = arith.constant 9 : index
    %69 = vector.load %arg2[%c0_48, %c9] : memref<4x20xf32, #tpu.memory_space<vmem>>, vector<4x1xf32>
    %c0_49 = arith.constant 0 : index
    %c1_50 = arith.constant 1 : index
    %c2_51 = arith.constant 2 : index
    %70 = vector.load %arg8[%c0_49, %c1_50, %c2_51] : memref<1x4x132xf32, #tpu.memory_space<vmem>>, vector<1x1x128xf32>
    %71 = vector.shape_cast %70 : vector<1x1x128xf32> to vector<1x128xf32>
    %72 = vector.broadcast %69 : vector<4x1xf32> to vector<4x128xf32>
    %73 = vector.broadcast %71 : vector<1x128xf32> to vector<4x128xf32>
    %74 = arith.mulf %72, %73 : vector<4x128xf32>
    %75 = arith.addf %68, %74 : vector<4x128xf32>
    %c0_52 = arith.constant 0 : index
    %c10 = arith.constant 10 : index
    %76 = vector.load %arg2[%c0_52, %c10] : memref<4x20xf32, #tpu.memory_space<vmem>>, vector<4x1xf32>
    %c0_53 = arith.constant 0 : index
    %c2_54 = arith.constant 2 : index
    %c2_55 = arith.constant 2 : index
    %77 = vector.load %arg8[%c0_53, %c2_54, %c2_55] : memref<1x4x132xf32, #tpu.memory_space<vmem>>, vector<1x1x128xf32>
    %78 = vector.shape_cast %77 : vector<1x1x128xf32> to vector<1x128xf32>
    %79 = vector.broadcast %76 : vector<4x1xf32> to vector<4x128xf32>
    %80 = vector.broadcast %78 : vector<1x128xf32> to vector<4x128xf32>
    %81 = arith.mulf %79, %80 : vector<4x128xf32>
    %82 = arith.addf %75, %81 : vector<4x128xf32>
    %c0_56 = arith.constant 0 : index
    %c11 = arith.constant 11 : index
    %83 = vector.load %arg2[%c0_56, %c11] : memref<4x20xf32, #tpu.memory_space<vmem>>, vector<4x1xf32>
    %c0_57 = arith.constant 0 : index
    %c3_58 = arith.constant 3 : index
    %c2_59 = arith.constant 2 : index
    %84 = vector.load %arg8[%c0_57, %c3_58, %c2_59] : memref<1x4x132xf32, #tpu.memory_space<vmem>>, vector<1x1x128xf32>
    %85 = vector.shape_cast %84 : vector<1x1x128xf32> to vector<1x128xf32>
    %86 = vector.broadcast %83 : vector<4x1xf32> to vector<4x128xf32>
    %87 = vector.broadcast %85 : vector<1x128xf32> to vector<4x128xf32>
    %88 = arith.mulf %86, %87 : vector<4x128xf32>
    %89 = arith.addf %82, %88 : vector<4x128xf32>
    %c0_60 = arith.constant 0 : index
    %c12 = arith.constant 12 : index
    %90 = vector.load %arg2[%c0_60, %c12] : memref<4x20xf32, #tpu.memory_space<vmem>>, vector<4x1xf32>
    %c0_61 = arith.constant 0 : index
    %c0_62 = arith.constant 0 : index
    %c3_63 = arith.constant 3 : index
    %91 = vector.load %arg8[%c0_61, %c0_62, %c3_63] : memref<1x4x132xf32, #tpu.memory_space<vmem>>, vector<1x1x128xf32>
    %92 = vector.shape_cast %91 : vector<1x1x128xf32> to vector<1x128xf32>
    %93 = vector.broadcast %90 : vector<4x1xf32> to vector<4x128xf32>
    %94 = vector.broadcast %92 : vector<1x128xf32> to vector<4x128xf32>
    %95 = arith.mulf %93, %94 : vector<4x128xf32>
    %96 = arith.addf %89, %95 : vector<4x128xf32>
    %c0_64 = arith.constant 0 : index
    %c13 = arith.constant 13 : index
    %97 = vector.load %arg2[%c0_64, %c13] : memref<4x20xf32, #tpu.memory_space<vmem>>, vector<4x1xf32>
    %c0_65 = arith.constant 0 : index
    %c1_66 = arith.constant 1 : index
    %c3_67 = arith.constant 3 : index
    %98 = vector.load %arg8[%c0_65, %c1_66, %c3_67] : memref<1x4x132xf32, #tpu.memory_space<vmem>>, vector<1x1x128xf32>
    %99 = vector.shape_cast %98 : vector<1x1x128xf32> to vector<1x128xf32>
    %100 = vector.broadcast %97 : vector<4x1xf32> to vector<4x128xf32>
    %101 = vector.broadcast %99 : vector<1x128xf32> to vector<4x128xf32>
    %102 = arith.mulf %100, %101 : vector<4x128xf32>
    %103 = arith.addf %96, %102 : vector<4x128xf32>
    %c0_68 = arith.constant 0 : index
    %c14 = arith.constant 14 : index
    %104 = vector.load %arg2[%c0_68, %c14] : memref<4x20xf32, #tpu.memory_space<vmem>>, vector<4x1xf32>
    %c0_69 = arith.constant 0 : index
    %c2_70 = arith.constant 2 : index
    %c3_71 = arith.constant 3 : index
    %105 = vector.load %arg8[%c0_69, %c2_70, %c3_71] : memref<1x4x132xf32, #tpu.memory_space<vmem>>, vector<1x1x128xf32>
    %106 = vector.shape_cast %105 : vector<1x1x128xf32> to vector<1x128xf32>
    %107 = vector.broadcast %104 : vector<4x1xf32> to vector<4x128xf32>
    %108 = vector.broadcast %106 : vector<1x128xf32> to vector<4x128xf32>
    %109 = arith.mulf %107, %108 : vector<4x128xf32>
    %110 = arith.addf %103, %109 : vector<4x128xf32>
    %c0_72 = arith.constant 0 : index
    %c15 = arith.constant 15 : index
    %111 = vector.load %arg2[%c0_72, %c15] : memref<4x20xf32, #tpu.memory_space<vmem>>, vector<4x1xf32>
    %c0_73 = arith.constant 0 : index
    %c3_74 = arith.constant 3 : index
    %c3_75 = arith.constant 3 : index
    %112 = vector.load %arg8[%c0_73, %c3_74, %c3_75] : memref<1x4x132xf32, #tpu.memory_space<vmem>>, vector<1x1x128xf32>
    %113 = vector.shape_cast %112 : vector<1x1x128xf32> to vector<1x128xf32>
    %114 = vector.broadcast %111 : vector<4x1xf32> to vector<4x128xf32>
    %115 = vector.broadcast %113 : vector<1x128xf32> to vector<4x128xf32>
    %116 = arith.mulf %114, %115 : vector<4x128xf32>
    %117 = arith.addf %110, %116 : vector<4x128xf32>
    %c0_76 = arith.constant 0 : index
    %c16 = arith.constant 16 : index
    %118 = vector.load %arg2[%c0_76, %c16] : memref<4x20xf32, #tpu.memory_space<vmem>>, vector<4x1xf32>
    %c0_77 = arith.constant 0 : index
    %c0_78 = arith.constant 0 : index
    %c4_79 = arith.constant 4 : index
    %119 = vector.load %arg8[%c0_77, %c0_78, %c4_79] : memref<1x4x132xf32, #tpu.memory_space<vmem>>, vector<1x1x128xf32>
    %120 = vector.shape_cast %119 : vector<1x1x128xf32> to vector<1x128xf32>
    %121 = vector.broadcast %118 : vector<4x1xf32> to vector<4x128xf32>
    %122 = vector.broadcast %120 : vector<1x128xf32> to vector<4x128xf32>
    %123 = arith.mulf %121, %122 : vector<4x128xf32>
    %124 = arith.addf %117, %123 : vector<4x128xf32>
    %c0_80 = arith.constant 0 : index
    %c17 = arith.constant 17 : index
    %125 = vector.load %arg2[%c0_80, %c17] : memref<4x20xf32, #tpu.memory_space<vmem>>, vector<4x1xf32>
    %c0_81 = arith.constant 0 : index
    %c1_82 = arith.constant 1 : index
    %c4_83 = arith.constant 4 : index
    %126 = vector.load %arg8[%c0_81, %c1_82, %c4_83] : memref<1x4x132xf32, #tpu.memory_space<vmem>>, vector<1x1x128xf32>
    %127 = vector.shape_cast %126 : vector<1x1x128xf32> to vector<1x128xf32>
    %128 = vector.broadcast %125 : vector<4x1xf32> to vector<4x128xf32>
    %129 = vector.broadcast %127 : vector<1x128xf32> to vector<4x128xf32>
    %130 = arith.mulf %128, %129 : vector<4x128xf32>
    %131 = arith.addf %124, %130 : vector<4x128xf32>
    %c0_84 = arith.constant 0 : index
    %c18 = arith.constant 18 : index
    %132 = vector.load %arg2[%c0_84, %c18] : memref<4x20xf32, #tpu.memory_space<vmem>>, vector<4x1xf32>
    %c0_85 = arith.constant 0 : index
    %c2_86 = arith.constant 2 : index
    %c4_87 = arith.constant 4 : index
    %133 = vector.load %arg8[%c0_85, %c2_86, %c4_87] : memref<1x4x132xf32, #tpu.memory_space<vmem>>, vector<1x1x128xf32>
    %134 = vector.shape_cast %133 : vector<1x1x128xf32> to vector<1x128xf32>
    %135 = vector.broadcast %132 : vector<4x1xf32> to vector<4x128xf32>
    %136 = vector.broadcast %134 : vector<1x128xf32> to vector<4x128xf32>
    %137 = arith.mulf %135, %136 : vector<4x128xf32>
    %138 = arith.addf %131, %137 : vector<4x128xf32>
    %c0_88 = arith.constant 0 : index
    %c19 = arith.constant 19 : index
    %139 = vector.load %arg2[%c0_88, %c19] : memref<4x20xf32, #tpu.memory_space<vmem>>, vector<4x1xf32>
    %c0_89 = arith.constant 0 : index
    %c3_90 = arith.constant 3 : index
    %c4_91 = arith.constant 4 : index
    %140 = vector.load %arg8[%c0_89, %c3_90, %c4_91] : memref<1x4x132xf32, #tpu.memory_space<vmem>>, vector<1x1x128xf32>
    %141 = vector.shape_cast %140 : vector<1x1x128xf32> to vector<1x128xf32>
    %142 = vector.broadcast %139 : vector<4x1xf32> to vector<4x128xf32>
    %143 = vector.broadcast %141 : vector<1x128xf32> to vector<4x128xf32>
    %144 = arith.mulf %142, %143 : vector<4x128xf32>
    %145 = arith.addf %138, %144 : vector<4x128xf32>
    %cst_92 = arith.constant dense<0.000000e+00> : vector<4xf32>
    %146 = vector.multi_reduction <add>, %145, %cst_92 [1] : vector<4x128xf32> to vector<4xf32>
    %147 = vector.shape_cast %146 : vector<4xf32> to vector<4x1xf32>
    %cst_93 = arith.constant 1.280000e+02 : f32
    %148 = vector.broadcast %cst_93 : f32 to vector<4x1xf32>
    %149 = arith.divf %147, %148 : vector<4x1xf32>
    %c0_94 = arith.constant 0 : index
    %c0_95 = arith.constant 0 : index
    %150 = vector.load %arg3[%c0_94, %c0_95] : memref<4x32xf32, #tpu.memory_space<vmem>>, vector<4x32xf32>
    %151 = vector.broadcast %149 : vector<4x1xf32> to vector<4x32xf32>
    %152 = arith.mulf %150, %151 : vector<4x32xf32>
    %cst_96 = arith.constant dense<0.000000e+00> : vector<32xf32>
    %153 = vector.multi_reduction <add>, %152, %cst_96 [0] : vector<4x32xf32> to vector<32xf32>
    %154 = vector.shape_cast %153 : vector<32xf32> to vector<1x32xf32>
    %c0_97 = arith.constant 0 : index
    %c0_98 = arith.constant 0 : index
    %155 = vector.load %arg4[%c0_97, %c0_98] : memref<1x32xf32, #tpu.memory_space<vmem>>, vector<1x32xf32>
    %156 = arith.addf %154, %155 : vector<1x32xf32>
    %cst_99 = arith.constant 0.000000e+00 : f32
    %157 = vector.broadcast %cst_99 : f32 to vector<1x32xf32>
    %158 = arith.maximumf %156, %157 : vector<1x32xf32>
    %c0_100 = arith.constant 0 : index
    %c0_101 = arith.constant 0 : index
    %159 = vector.load %arg5[%c0_100, %c0_101] : memref<4x32xf32, #tpu.memory_space<vmem>>, vector<4x32xf32>
    %160 = vector.broadcast %158 : vector<1x32xf32> to vector<4x32xf32>
    %161 = arith.mulf %159, %160 : vector<4x32xf32>
    %cst_102 = arith.constant dense<0.000000e+00> : vector<4xf32>
    %162 = vector.multi_reduction <add>, %161, %cst_102 [1] : vector<4x32xf32> to vector<4xf32>
    %163 = vector.shape_cast %162 : vector<4xf32> to vector<4x1xf32>
    %c0_103 = arith.constant 0 : index
    %c0_104 = arith.constant 0 : index
    %164 = vector.load %arg6[%c0_103, %c0_104] : memref<4x1xf32, #tpu.memory_space<vmem>>, vector<4x1xf32>
    %165 = arith.addf %163, %164 : vector<4x1xf32>
    %166 = arith.negf %165 : vector<4x1xf32>
    %167 = math.exp %166 : vector<4x1xf32>
    %cst_105 = arith.constant 1.000000e+00 : f32
    %168 = vector.broadcast %cst_105 : f32 to vector<4x1xf32>
    %169 = arith.addf %168, %167 : vector<4x1xf32>
    %170 = arith.divf %168, %169 : vector<4x1xf32>
    %c0_106 = arith.constant 0 : index
    %c0_107 = arith.constant 0 : index
    %c0_108 = arith.constant 0 : index
    %171 = vector.load %arg1[%c0_106, %c0_107, %c0_108] : memref<1x4x128xf32, #tpu.memory_space<vmem>>, vector<1x4x128xf32>
    %172 = vector.shape_cast %171 : vector<1x4x128xf32> to vector<4x128xf32>
    %173 = vector.broadcast %170 : vector<4x1xf32> to vector<4x128xf32>
    %174 = arith.mulf %145, %173 : vector<4x128xf32>
    %175 = arith.addf %172, %174 : vector<4x128xf32>
    %c0_109 = arith.constant 0 : index
    %c0_110 = arith.constant 0 : index
    %c0_111 = arith.constant 0 : index
    %176 = vector.load %arg7[%c0_109, %c0_110, %c0_111] : memref<1x4x128xf32, #tpu.memory_space<vmem>>, vector<1x4x128xf32>
    %177 = vector.shape_cast %176 : vector<1x4x128xf32> to vector<4x128xf32>
    %178 = vector.shape_cast %175 : vector<4x128xf32> to vector<1x4x128xf32>
    tpu.vector_store %arg7[%c0_109, %c0_110, %c0_111], %178 {strides = array<i32>} : memref<1x4x128xf32, #tpu.memory_space<vmem>>, vector<1x4x128xf32>,
    return
  }
  func.func @transform_0(%arg0: i32) -> (i32, i32, i32) {
    %c0_i32 = arith.constant 0 : i32
    %c0_i32_0 = arith.constant 0 : i32
    %c0_i32_1 = arith.constant 0 : i32
    return %arg0, %c0_i32, %c0_i32_0 : i32, i32, i32
  }
  func.func @transform_1(%arg0: i32) -> (i32, i32) {
    %c0_i32 = arith.constant 0 : i32
    %c0_i32_0 = arith.constant 0 : i32
    %c0_i32_1 = arith.constant 0 : i32
    return %c0_i32, %c0_i32_0 : i32, i32
  }
  func.func @transform_2(%arg0: i32) -> (i32, i32) {
    %c0_i32 = arith.constant 0 : i32
    %c0_i32_0 = arith.constant 0 : i32
    %c0_i32_1 = arith.constant 0 : i32
    return %c0_i32, %c0_i32_0 : i32, i32
  }
  func.func @transform_3(%arg0: i32) -> (i32, i32) {
    %c0_i32 = arith.constant 0 : i32
    %c0_i32_0 = arith.constant 0 : i32
    %c0_i32_1 = arith.constant 0 : i32
    return %c0_i32, %c0_i32_0 : i32, i32
  }
  func.func @transform_4(%arg0: i32) -> (i32, i32) {
    %c0_i32 = arith.constant 0 : i32
    %c0_i32_0 = arith.constant 0 : i32
    %c0_i32_1 = arith.constant 0 : i32
    return %c0_i32, %c0_i32_0 : i32, i32
  }
  func.func @transform_5(%arg0: i32) -> (i32, i32) {
    %c0_i32 = arith.constant 0 : i32
    %c0_i32_0 = arith.constant 0 : i32
    %c0_i32_1 = arith.constant 0 : i32
    return %c0_i32, %c0_i32_0 : i32, i32
  }
  func.func @transform_6(%arg0: i32) -> (i32, i32, i32) {
    %c0_i32 = arith.constant 0 : i32
    %c0_i32_0 = arith.constant 0 : i32
    %c0_i32_1 = arith.constant 0 : i32
    return %arg0, %c0_i32, %c0_i32_0 : i32, i32, i32
  }
}

</mosaic_0001>

<llo_original>
// kernel: tpu_custom_call.1
$region0: #{tpu_custom_call.1}
  #allocation0 [shape = 'u32[]', space=smem, size = 0x4, offset = 0x4, fixed_abs, tag = 'smem constant byte address 0x4 - core index']
  #allocation1 [shape = 'u32[144,128]{1,0:T(1,128)}', space=vmem, size = 0x12000, scoped, tag = 'internal scratch']
  #allocation2 [shape = 'f32[1,4,132]{2,1,0:T(4,128)}', space=vmem, size = 0x1000, scoped, tag = 'scratch operand']
  %s0 = inlined_call_operand.hbm [shape: f32[2,4,128], index: 0, kind: input, shape index: {}]
  %s1 = inlined_call_operand.vmem [shape: f32[4,20], index: 1, kind: input, shape index: {}]
  %s2 = inlined_call_operand.vmem [shape: f32[4,32], index: 2, kind: input, shape index: {}]
  %s3 = inlined_call_operand.vmem [shape: f32[1,32], index: 3, kind: input, shape index: {}]
  %s4 = inlined_call_operand.vmem [shape: f32[4,32], index: 4, kind: input, shape index: {}]
  %s5 = inlined_call_operand.vmem [shape: f32[4,1], index: 5, kind: input, shape index: {}]
  %s6 = inlined_call_operand.hbm [shape: f32[2,4,128], index: 6, kind: output, shape index: {}]
  %s7 = sld [smem:[#allocation0]]
  $region61: #{tpu_custom_call.1} parent=0
    _
  %s9 = ssub.s32 1, %s7
  %s10 = scalar_select 0, %s9, %s7
  $region1: #{tpu_custom_call.1} parent=0
    #allocation3 [shape = 'u8[4096]{0}', space=vmem, size = 0x1000, scoped, tag = 'input window, operand 0']
    #allocation4 [shape = 's32[2]{0}', space=sflag, size = 0x8, scoped, tag = 'scoped memory for tpu_custom_call.1']
    #allocation5 [shape = 's32[2]{0}', space=sflag, size = 0x8, scoped, tag = 'scoped memory for tpu_custom_call.1']
    #allocation6 [shape = 'u8[4096]{0}', space=vmem, size = 0x1000, scoped, tag = 'output window, operand 0']
    %11 = vsyncpa [#allocation4], 0
    %s12 = scalar_lea.sflag [#allocation4], 1
    %13 = vsyncpa %s12, 0
    %14 = vsyncpa [#allocation5], 0
    %s15 = scalar_lea.sflag [#allocation5], 1
    %16 = vsyncpa %s15, 0
    loop: start=0, step=1, limit=4
    $region2: #{tpu_custom_call.1} parent=1 // loop_pre_header
      _
    $region3: #{tpu_custom_call.1} parent=1 // loop_header
      %s18 = sphi 0, %s22
      %p19 = scmp.ge.s32.totalorder %s18, 4
      %s28 = sphi 0, %s30
      %s31 = sphi 0, %s28
      %s32 = sphi 0, %s31
      %s48 = sphi 0, %s32
      %s52 = sphi 0, %s52
      %s54 = sphi 0, %s52
      %s55 = sphi 0, %s54
      %s69 = sphi 0, %s55
      %s73 = sphi 0, %s73
      %s75 = sphi 0, %s73
      %s76 = sphi 0, %s75
      %s90 = sphi 0, %s76
      %s94 = sphi 0, %s94
      %s96 = sphi 0, %s94
      %s97 = sphi 0, %s96
      %s111 = sphi 0, %s97
      %s115 = sphi 0, %s115
      %s117 = sphi 0, %s115
      %s118 = sphi 0, %s117
      %s132 = sphi 0, %s118
      %s136 = sphi 0, %s136
      %s138 = sphi 0, %s136
      %s139 = sphi 0, %s138
      %s153 = sphi 0, %s139
      %s159 = sphi 0, %s161
      %s162 = sphi 0, %s159
      %s163 = sphi 0, %s162
      %s179 = sphi 0, %s163
    $region4: #{tpu_custom_call.1} parent=1 // loop_header_branch
      %21 = sbr.rel (%p19) target = $region8
    $region5: #{tpu_custom_call.1} parent=1 // loop_body
      %s23 = ssub.s32 %s18, 1
      %s24 = ssub.s32 %s18, 2
      %s25 = sadd.s32 %s18, 1
      %s26 = ssub.s32 %s18, %s25
      %p27 = scmp.eq.s32.totalorder %s26, 0
      %s29 = sadd.s32 %s28, 1
      %s30 = scalar_select %p27, %s28, %s29
      %p33 = pneg %p27
      %p34 = scmp.eq.s32.totalorder %s18, 1
      %p35 = por %p33, %p34
      %p36 = scmp.ne.s32.totalorder %s28, %s31
      %p37 = scmp.eq.s32.totalorder %s18, 0
      %p38 = por %p36, %p37
      %p39 = scmp.ne.s32.totalorder %s28, %s31
      %p40 = scmp.eq.s32.totalorder %s23, 1
      %p41 = por %p39, %p40
      %p42 = scmp.ne.s32.totalorder %s31, %s32
      %p43 = scmp.eq.s32.totalorder %s23, 0
      %p44 = por %p42, %p43
      %p45 = scmp.ne.s32.totalorder %s31, %s32
      %p46 = scmp.eq.s32.totalorder %s24, 1
      %p47 = por %p45, %p46
      %p49 = scmp.ne.s32.totalorder %s32, %s48
      %p50 = scmp.eq.s32.totalorder %s24, 0
      %p51 = por %p49, %p50
      %s53 = sadd.s32 %s52, 1
      %p56 = scmp.eq.s32.totalorder %s18, 1
      %p57 = scmp.ne.s32.totalorder %s52, %s54
      %p58 = scmp.eq.s32.totalorder %s18, 0
      %p59 = por %p57, %p58
      %p60 = scmp.ne.s32.totalorder %s52, %s54
      %p61 = scmp.eq.s32.totalorder %s23, 1
      %p62 = por %p60, %p61
      %p63 = scmp.ne.s32.totalorder %s54, %s55
      %p64 = scmp.eq.s32.totalorder %s23, 0
      %p65 = por %p63, %p64
      %p66 = scmp.ne.s32.totalorder %s54, %s55
      %p67 = scmp.eq.s32.totalorder %s24, 1
      %p68 = por %p66, %p67
      %p70 = scmp.ne.s32.totalorder %s55, %s69
      %p71 = scmp.eq.s32.totalorder %s24, 0
      %p72 = por %p70, %p71
      %s74 = sadd.s32 %s73, 1
      %p77 = scmp.eq.s32.totalorder %s18, 1
      %p78 = scmp.ne.s32.totalorder %s73, %s75
      %p79 = scmp.eq.s32.totalorder %s18, 0
      %p80 = por %p78, %p79
      %p81 = scmp.ne.s32.totalorder %s73, %s75
      %p82 = scmp.eq.s32.totalorder %s23, 1
      %p83 = por %p81, %p82
      %p84 = scmp.ne.s32.totalorder %s75, %s76
      %p85 = scmp.eq.s32.totalorder %s23, 0
      %p86 = por %p84, %p85
      %p87 = scmp.ne.s32.totalorder %s75, %s76
      %p88 = scmp.eq.s32.totalorder %s24, 1
      %p89 = por %p87, %p88
      %p91 = scmp.ne.s32.totalorder %s76, %s90
      %p92 = scmp.eq.s32.totalorder %s24, 0
      %p93 = por %p91, %p92
      %s95 = sadd.s32 %s94, 1
      %p98 = scmp.eq.s32.totalorder %s18, 1
      %p99 = scmp.ne.s32.totalorder %s94, %s96
      %p100 = scmp.eq.s32.totalorder %s18, 0
      %p101 = por %p99, %p100
      %p102 = scmp.ne.s32.totalorder %s94, %s96
      %p103 = scmp.eq.s32.totalorder %s23, 1
      %p104 = por %p102, %p103
      %p105 = scmp.ne.s32.totalorder %s96, %s97
      %p106 = scmp.eq.s32.totalorder %s23, 0
      %p107 = por %p105, %p106
      %p108 = scmp.ne.s32.totalorder %s96, %s97
      %p109 = scmp.eq.s32.totalorder %s24, 1
      %p110 = por %p108, %p109
      %p112 = scmp.ne.s32.totalorder %s97, %s111
      %p113 = scmp.eq.s32.totalorder %s24, 0
      %p114 = por %p112, %p113
      %s116 = sadd.s32 %s115, 1
      %p119 = scmp.eq.s32.totalorder %s18, 1
      %p120 = scmp.ne.s32.totalorder %s115, %s117
      %p121 = scmp.eq.s32.totalorder %s18, 0
      %p122 = por %p120, %p121
      %p123 = scmp.ne.s32.totalorder %s115, %s117
      %p124 = scmp.eq.s32.totalorder %s23, 1
      %p125 = por %p123, %p124
      %p126 = scmp.ne.s32.totalorder %s117, %s118
      %p127 = scmp.eq.s32.totalorder %s23, 0
      %p128 = por %p126, %p127
      %p129 = scmp.ne.s32.totalorder %s117, %s118
      %p130 = scmp.eq.s32.totalorder %s24, 1
      %p131 = por %p129, %p130
      %p133 = scmp.ne.s32.totalorder %s118, %s132
      %p134 = scmp.eq.s32.totalorder %s24, 0
      %p135 = por %p133, %p134
      %s137 = sadd.s32 %s136, 1
      %p140 = scmp.eq.s32.totalorder %s18, 1
      %p141 = scmp.ne.s32.totalorder %s136, %s138
      %p142 = scmp.eq.s32.totalorder %s18, 0
      %p143 = por %p141, %p142
      %p144 = scmp.ne.s32.totalorder %s136, %s138
      %p145 = scmp.eq.s32.totalorder %s23, 1
      %p146 = por %p144, %p145
      %p147 = scmp.ne.s32.totalorder %s138, %s139
      %p148 = scmp.eq.s32.totalorder %s23, 0
      %p149 = por %p147, %p148
      %p150 = scmp.ne.s32.totalorder %s138, %s139
      %p151 = scmp.eq.s32.totalorder %s24, 1
      %p152 = por %p150, %p151
      %p154 = scmp.ne.s32.totalorder %s139, %s153
      %p155 = scmp.eq.s32.totalorder %s24, 0
      %p156 = por %p154, %p155
      %s157 = ssub.s32 %s18, %s25
      %p158 = scmp.eq.s32.totalorder %s157, 0
      %s160 = sadd.s32 %s159, 1
      %s161 = scalar_select %p158, %s159, %s160
      %p164 = pneg %p158
      %p165 = scmp.eq.s32.totalorder %s18, 1
      %p166 = por %p164, %p165
      %p167 = scmp.ne.s32.totalorder %s159, %s162
      %p168 = scmp.eq.s32.totalorder %s18, 0
      %p169 = por %p167, %p168
      %p170 = scmp.ne.s32.totalorder %s159, %s162
      %p171 = scmp.eq.s32.totalorder %s23, 1
      %p172 = por %p170, %p171
      %p173 = scmp.ne.s32.totalorder %s162, %s163
      %p174 = scmp.eq.s32.totalorder %s23, 0
      %p175 = por %p173, %p174
      %p176 = scmp.ne.s32.totalorder %s162, %s163
      %p177 = scmp.eq.s32.totalorder %s24, 1
      %p178 = por %p176, %p177
      %p180 = scmp.ne.s32.totalorder %s163, %s179
      %p181 = scmp.eq.s32.totalorder %s24, 0
      %p182 = por %p180, %p181
      %p183 = scmp.le.s32.totalorder 1, %s18
      %p184 = scmp.lt.s32.totalorder %s18, 3
      %p185 = pnand %p183, %p184
      %p186 = pneg %p185
      // Predicated region
      $region9: #{tpu_custom_call.1} parent=5 // pred_check
        _
      $region10: #{tpu_custom_call.1} parent=5 // pred_check_branch
        %188 = sbr.rel (%p185) target = $region12
      $region11: #{tpu_custom_call.1} parent=5 // pred_region
        %s189 = ssub.s32 %s18, 1
        // Predicated region
        $region13: #{tpu_custom_call.1} parent=11 // pred_check
          %p190 = pneg %p65
        $region14: #{tpu_custom_call.1} parent=11 // pred_check_branch
          %192 = sbr.rel (%p190) target = $region16
        $region15: #{tpu_custom_call.1} parent=11 // pred_region
          _
        $region16: #{tpu_custom_call.1} parent=11 // pred_fallthru
          _
        // Predicated region
        $region17: #{tpu_custom_call.1} parent=11 // pred_check
          %p193 = pneg %p86
        $region18: #{tpu_custom_call.1} parent=11 // pred_check_branch
          %195 = sbr.rel (%p193) target = $region20
        $region19: #{tpu_custom_call.1} parent=11 // pred_region
          _
        $region20: #{tpu_custom_call.1} parent=11 // pred_fallthru
          _
        // Predicated region
        $region21: #{tpu_custom_call.1} parent=11 // pred_check
          %p196 = pneg %p107
        $region22: #{tpu_custom_call.1} parent=11 // pred_check_branch
          %198 = sbr.rel (%p196) target = $region24
        $region23: #{tpu_custom_call.1} parent=11 // pred_region
          _
        $region24: #{tpu_custom_call.1} parent=11 // pred_fallthru
          _
        // Predicated region
        $region25: #{tpu_custom_call.1} parent=11 // pred_check
          %p199 = pneg %p128
        $region26: #{tpu_custom_call.1} parent=11 // pred_check_branch
          %201 = sbr.rel (%p199) target = $region28
        $region27: #{tpu_custom_call.1} parent=11 // pred_region
          _
        $region28: #{tpu_custom_call.1} parent=11 // pred_fallthru
          _
        // Predicated region
        $region29: #{tpu_custom_call.1} parent=11 // pred_check
          %p202 = pneg %p149
        $region30: #{tpu_custom_call.1} parent=11 // pred_check_branch
          %204 = sbr.rel (%p202) target = $region32
        $region31: #{tpu_custom_call.1} parent=11 // pred_region
          _
        $region32: #{tpu_custom_call.1} parent=11 // pred_fallthru
          _
      $region12: #{tpu_custom_call.1} parent=5 // pred_fallthru
        _
      %p205 = scmp.lt.s32.totalorder %s18, 2
      // Predicated region
      $region33: #{tpu_custom_call.1} parent=5 // pred_check
        %p206 = pneg %p205
      $region34: #{tpu_custom_call.1} parent=5 // pred_check_branch
        %208 = sbr.rel (%p206) target = $region36
      $region35: #{tpu_custom_call.1} parent=5 // pred_region
        // Predicated region
        $region37: #{tpu_custom_call.1} parent=35 // pred_check
          %p209 = pneg %p38
        $region38: #{tpu_custom_call.1} parent=35 // pred_check_branch
          %211 = sbr.rel (%p209) target = $region40
        $region39: #{tpu_custom_call.1} parent=35 // pred_region
          %s212 = sand.u32 %s28, 1
          %s213 = scalar_lea.sflag [#allocation4], %s212
          %s214 = sand.u32 %s28, 1
          %s215 = smul.addr %s214, 4
          %s216 = scalar_lea.vmem [#allocation3], %s215
          %s218 = ssub.s32 64, 64
          %219 = vsyncadd %s213, %s218
          %s220 = smul.addr %s18, 64
          %s221 = scalar_lea.hbm %s0, %s220
          %s223 = sshll.u32 %s216, 4
          %s224 = int_to_ptr.vmem [resolvable:$true] %s223
          %226 = dma.hbm_to_vmem [thread:$0]  %s221, 64, %s224, %s213
        $region40: #{tpu_custom_call.1} parent=35 // pred_fallthru
          _
      $region36: #{tpu_custom_call.1} parent=5 // pred_fallthru
        _
      %p227 = scmp.le.s32.totalorder 1, %s18
      %p228 = scmp.lt.s32.totalorder %s18, 3
      %p229 = pnand %p227, %p228
      %p230 = pneg %p229
      // Predicated region
      $region41: #{tpu_custom_call.1} parent=5 // pred_check
        _
      $region42: #{tpu_custom_call.1} parent=5 // pred_check_branch
        %232 = sbr.rel (%p229) target = $region44
      $region43: #{tpu_custom_call.1} parent=5 // pred_region
        %s233 = ssub.s32 %s18, 1
        %s234 = sand.u32 %s31, 1
        %s235 = scalar_lea.sflag [#allocation4], %s234
        %s236 = sand.u32 %s31, 1
        %s237 = smul.addr %s236, 4
        %s238 = scalar_lea.vmem [#allocation3], %s237
        // Predicated region
        $region45: #{tpu_custom_call.1} parent=43 // pred_check
          %p239 = pneg %p44
        $region46: #{tpu_custom_call.1} parent=43 // pred_check_branch
          %241 = sbr.rel (%p239) target = $region48
        $region47: #{tpu_custom_call.1} parent=43 // pred_region
          %242 = dma.done %s235, 64
        $region48: #{tpu_custom_call.1} parent=43 // pred_fallthru
          _
        %s243 = sand.u32 %s31, 1
        %s244 = scalar_lea.sflag [#allocation4], %s243
        %s245 = sand.u32 %s31, 1
        %s246 = smul.addr %s245, 4
        %s247 = scalar_lea.vmem [#allocation3], %s246
        %p248 = pneg %p44
        %p249 = pneg %p41
        %p250 = pneg %p65
        %p251 = pneg %p62
        %p252 = pneg %p86
        %p253 = pneg %p83
        %p254 = pneg %p107
        %p255 = pneg %p104
        %p256 = pneg %p128
        %p257 = pneg %p125
        %p258 = pneg %p149
        %p259 = pneg %p146
        %p260 = pneg %p175
        %p261 = pneg %p172
        %s262 = sand.u32 %s162, 1
        %s263 = scalar_lea.sflag [#allocation5], %s262
        %s264 = sand.u32 %s162, 1
        %s265 = smul.addr %s264, 4
        %s266 = scalar_lea.vmem [#allocation6], %s265
        %vm267 = vcmask 11264
        %268 = vst.msk [vmem:[#allocation2] sm:$0xf] %vm267, 0.0
        %vm269 = vcmask 27664
        %270 = vst.msk [vmem:[#allocation2 + $0x4] sm:$0xf] %vm269, 0.0
        %v271 = vld [vmem:[%s238] sm:$0xf]
        %273 = vrot.lane.b32.xlu0 %v271, 2
        %v274 = vpop.permute.xlu0 %273
        %v275 = vrot.slane %v274, 4
        %vm276 = vcmask 15360
        %v277 = vsel %vm276, %v275, %v274
        %vm279 = vcmask 1043472
        %vm280 = vcmask 15364
        %vm281 = vmor %vm280, %vm279
        %282 = vst.msk [vmem:[#allocation2] sm:$0xff] %vm281, %v277
        %v283 = vld [vmem:[%s1] sm:$0xf]
        %v284 = vld [vmem:[#allocation2] sm:$0x1]
        %286 = vset.pattern.permute.xlu0 0
        %287 = vperm.xlu0 %286, %v283
        %v288 = vpop.permute.xlu0 %287
        %v290 = vlaneseq
        %v291 = vshrl.u32 %v290, 7
        %v292 = vsub.s32 0, %v291
        %v293 = vrot.slane %v284, %v292
        %v294 = vmul.f32 %v288, %v293
        %v295 = vadd.f32 %v294, 0.0
        %v296 = vld [vmem:[#allocation2 + $0x1] sm:$0x1]
        %297 = vset.pattern.permute.xlu0 1
        %298 = vperm.xlu0 %297, %v283
        %v299 = vpop.permute.xlu0 %298
        %v301 = vlaneseq
        %v302 = vshrl.u32 %v301, 7
        %v303 = vsub.s32 0, %v302
        %v304 = vrot.slane %v296, %v303
        %v305 = vmul.f32 %v299, %v304
        %v306 = vadd.f32 %v295, %v305
        %v307 = vld [vmem:[#allocation2 + $0x2] sm:$0x1]
        %308 = vset.pattern.permute.xlu0 2
        %309 = vperm.xlu0 %308, %v283
        %v310 = vpop.permute.xlu0 %309
        %v312 = vlaneseq
        %v313 = vshrl.u32 %v312, 7
        %v314 = vsub.s32 0, %v313
        %v315 = vrot.slane %v307, %v314
        %v316 = vmul.f32 %v310, %v315
        %v317 = vadd.f32 %v306, %v316
        %v318 = vld [vmem:[#allocation2 + $0x3] sm:$0x1]
        %319 = vset.pattern.permute.xlu0 3
        %320 = vperm.xlu0 %319, %v283
        %v321 = vpop.permute.xlu0 %320
        %v323 = vlaneseq
        %v324 = vshrl.u32 %v323, 7
        %v325 = vsub.s32 0, %v324
        %v326 = vrot.slane %v318, %v325
        %v327 = vmul.f32 %v321, %v326
        %v328 = vadd.f32 %v317, %v327
        %v329 = vld [vmem:[#allocation2] sm:$0x11]
        %330 = vset.pattern.permute.xlu0 4
        %331 = vperm.xlu0 %330, %v283
        %v332 = vpop.permute.xlu0 %331
        %v335 = vlaneseq
        %v336 = vshrl.u32 %v335, 7
        %v337 = vsub.s32 0, %v336
        %v338 = vrot.slane %v329, %v337
        %v339 = vlaneseq
        %v340 = vshrl.u32 %v339, 7
        %v341 = vsub.s32 4, %v340
        %v342 = vrot.slane %v329, %v341
        %v345 = vlaneseq
        %v346 = vshrl.u32 %v345, 7
        %v347 = vsub.s32 0, %v346
        %v348 = vrot.slane %v338, %v347
        %v349 = vlaneseq
        %v350 = vshrl.u32 %v349, 7
        %v351 = vsub.s32 0, %v350
        %v352 = vrot.slane %v342, %v351
        %v353 = vmul.f32 %v332, %v348
        %v354 = vmul.f32 %v332, %v352
        %357 = vrot.lane.b32.xlu0 %v353, 127
        %v358 = vpop.permute.xlu0 %357
        %359 = vrot.lane.b32.xlu0 %v354, 127
        %v360 = vpop.permute.xlu0 %359
        %vm361 = vcmask 1039360
        %v362 = vsel %vm361, %v358, %v360
        %v364 = vadd.f32 %v328, %v362
        %v365 = vld [vmem:[#allocation2 + $0x1] sm:$0x11]
        %366 = vset.pattern.permute.xlu0 5
        %367 = vperm.xlu0 %366, %v283
        %v368 = vpop.permute.xlu0 %367
        %v371 = vlaneseq
        %v372 = vshrl.u32 %v371, 7
        %v373 = vsub.s32 0, %v372
        %v374 = vrot.slane %v365, %v373
        %v375 = vlaneseq
        %v376 = vshrl.u32 %v375, 7
        %v377 = vsub.s32 4, %v376
        %v378 = vrot.slane %v365, %v377
        %v381 = vlaneseq
        %v382 = vshrl.u32 %v381, 7
        %v383 = vsub.s32 0, %v382
        %v384 = vrot.slane %v374, %v383
        %v385 = vlaneseq
        %v386 = vshrl.u32 %v385, 7
        %v387 = vsub.s32 0, %v386
        %v388 = vrot.slane %v378, %v387
        %v389 = vmul.f32 %v368, %v384
        %v390 = vmul.f32 %v368, %v388
        %393 = vrot.lane.b32.xlu0 %v389, 127
        %v394 = vpop.permute.xlu0 %393
        %395 = vrot.lane.b32.xlu0 %v390, 127
        %v396 = vpop.permute.xlu0 %395
        %v397 = vsel %vm361, %v394, %v396
        %v399 = vadd.f32 %v364, %v397
        %v400 = vld [vmem:[#allocation2 + $0x2] sm:$0x11]
        %401 = vset.pattern.permute.xlu0 6
        %402 = vperm.xlu0 %401, %v283
        %v403 = vpop.permute.xlu0 %402
        %v406 = vlaneseq
        %v407 = vshrl.u32 %v406, 7
        %v408 = vsub.s32 0, %v407
        %v409 = vrot.slane %v400, %v408
        %v410 = vlaneseq
        %v411 = vshrl.u32 %v410, 7
        %v412 = vsub.s32 4, %v411
        %v413 = vrot.slane %v400, %v412
        %v416 = vlaneseq
        %v417 = vshrl.u32 %v416, 7
        %v418 = vsub.s32 0, %v417
        %v419 = vrot.slane %v409, %v418
        %v420 = vlaneseq
        %v421 = vshrl.u32 %v420, 7
        %v422 = vsub.s32 0, %v421
        %v423 = vrot.slane %v413, %v422
        %v424 = vmul.f32 %v403, %v419
        %v425 = vmul.f32 %v403, %v423
        %428 = vrot.lane.b32.xlu0 %v424, 127
        %v429 = vpop.permute.xlu0 %428
        %430 = vrot.lane.b32.xlu0 %v425, 127
        %v431 = vpop.permute.xlu0 %430
        %v432 = vsel %vm361, %v429, %v431
        %v434 = vadd.f32 %v399, %v432
        %v435 = vld [vmem:[#allocation2 + $0x3] sm:$0x11]
        %436 = vset.pattern.permute.xlu0 7
        %437 = vperm.xlu0 %436, %v283
        %v438 = vpop.permute.xlu0 %437
        %v441 = vlaneseq
        %v442 = vshrl.u32 %v441, 7
        %v443 = vsub.s32 0, %v442
        %v444 = vrot.slane %v435, %v443
        %v445 = vlaneseq
        %v446 = vshrl.u32 %v445, 7
        %v447 = vsub.s32 4, %v446
        %v448 = vrot.slane %v435, %v447
        %v451 = vlaneseq
        %v452 = vshrl.u32 %v451, 7
        %v453 = vsub.s32 0, %v452
        %v454 = vrot.slane %v444, %v453
        %v455 = vlaneseq
        %v456 = vshrl.u32 %v455, 7
        %v457 = vsub.s32 0, %v456
        %v458 = vrot.slane %v448, %v457
        %v459 = vmul.f32 %v438, %v454
        %v460 = vmul.f32 %v438, %v458
        %463 = vrot.lane.b32.xlu0 %v459, 127
        %v464 = vpop.permute.xlu0 %463
        %465 = vrot.lane.b32.xlu0 %v460, 127
        %v466 = vpop.permute.xlu0 %465
        %v467 = vsel %vm361, %v464, %v466
        %v469 = vadd.f32 %v434, %v467
        %470 = vset.pattern.permute.xlu0 8
        %471 = vperm.xlu0 %470, %v283
        %v472 = vpop.permute.xlu0 %471
        %v474 = vmul.f32 %v472, %v348
        %v475 = vmul.f32 %v472, %v352
        %478 = vrot.lane.b32.xlu0 %v474, 126
        %v479 = vpop.permute.xlu0 %478
        %480 = vrot.lane.b32.xlu0 %v475, 126
        %v481 = vpop.permute.xlu0 %480
        %vm482 = vcmask 1031168
        %v483 = vsel %vm482, %v479, %v481
        %v485 = vadd.f32 %v469, %v483
        %486 = vset.pattern.permute.xlu0 9
        %487 = vperm.xlu0 %486, %v283
        %v488 = vpop.permute.xlu0 %487
        %v490 = vmul.f32 %v488, %v384
        %v491 = vmul.f32 %v488, %v388
        %494 = vrot.lane.b32.xlu0 %v490, 126
        %v495 = vpop.permute.xlu0 %494
        %496 = vrot.lane.b32.xlu0 %v491, 126
        %v497 = vpop.permute.xlu0 %496
        %v498 = vsel %vm482, %v495, %v497
        %v500 = vadd.f32 %v485, %v498
        %501 = vset.pattern.permute.xlu0 10
        %502 = vperm.xlu0 %501, %v283
        %v503 = vpop.permute.xlu0 %502
        %v505 = vmul.f32 %v503, %v419
        %v506 = vmul.f32 %v503, %v423
        %509 = vrot.lane.b32.xlu0 %v505, 126
        %v510 = vpop.permute.xlu0 %509
        %511 = vrot.lane.b32.xlu0 %v506, 126
        %v512 = vpop.permute.xlu0 %511
        %v513 = vsel %vm482, %v510, %v512
        %v515 = vadd.f32 %v500, %v513
        %516 = vset.pattern.permute.xlu0 11
        %517 = vperm.xlu0 %516, %v283
        %v518 = vpop.permute.xlu0 %517
        %v520 = vmul.f32 %v518, %v454
        %v521 = vmul.f32 %v518, %v458
        %524 = vrot.lane.b32.xlu0 %v520, 126
        %v525 = vpop.permute.xlu0 %524
        %526 = vrot.lane.b32.xlu0 %v521, 126
        %v527 = vpop.permute.xlu0 %526
        %v528 = vsel %vm482, %v525, %v527
        %v530 = vadd.f32 %v515, %v528
        %531 = vset.pattern.permute.xlu0 12
        %532 = vperm.xlu0 %531, %v283
        %v533 = vpop.permute.xlu0 %532
        %v535 = vmul.f32 %v533, %v348
        %v536 = vmul.f32 %v533, %v352
        %539 = vrot.lane.b32.xlu0 %v535, 125
        %v540 = vpop.permute.xlu0 %539
        %541 = vrot.lane.b32.xlu0 %v536, 125
        %v542 = vpop.permute.xlu0 %541
        %vm543 = vcmask 1022976
        %v544 = vsel %vm543, %v540, %v542
        %v546 = vadd.f32 %v530, %v544
        %547 = vset.pattern.permute.xlu0 13
        %548 = vperm.xlu0 %547, %v283
        %v549 = vpop.permute.xlu0 %548
        %v551 = vmul.f32 %v549, %v384
        %v552 = vmul.f32 %v549, %v388
        %555 = vrot.lane.b32.xlu0 %v551, 125
        %v556 = vpop.permute.xlu0 %555
        %557 = vrot.lane.b32.xlu0 %v552, 125
        %v558 = vpop.permute.xlu0 %557
        %v559 = vsel %vm543, %v556, %v558
        %v561 = vadd.f32 %v546, %v559
        %562 = vset.pattern.permute.xlu0 14
        %563 = vperm.xlu0 %562, %v283
        %v564 = vpop.permute.xlu0 %563
        %v566 = vmul.f32 %v564, %v419
        %v567 = vmul.f32 %v564, %v423
        %570 = vrot.lane.b32.xlu0 %v566, 125
        %v571 = vpop.permute.xlu0 %570
        %572 = vrot.lane.b32.xlu0 %v567, 125
        %v573 = vpop.permute.xlu0 %572
        %v574 = vsel %vm543, %v571, %v573
        %v576 = vadd.f32 %v561, %v574
        %577 = vset.pattern.permute.xlu0 15
        %578 = vperm.xlu0 %577, %v283
        %v579 = vpop.permute.xlu0 %578
        %v581 = vmul.f32 %v579, %v454
        %v582 = vmul.f32 %v579, %v458
        %585 = vrot.lane.b32.xlu0 %v581, 125
        %v586 = vpop.permute.xlu0 %585
        %587 = vrot.lane.b32.xlu0 %v582, 125
        %v588 = vpop.permute.xlu0 %587
        %v589 = vsel %vm543, %v586, %v588
        %v591 = vadd.f32 %v576, %v589
        %592 = vset.pattern.permute.xlu0 16
        %593 = vperm.xlu0 %592, %v283
        %v594 = vpop.permute.xlu0 %593
        %v596 = vmul.f32 %v594, %v348
        %v597 = vmul.f32 %v594, %v352
        %600 = vrot.lane.b32.xlu0 %v596, 124
        %v601 = vpop.permute.xlu0 %600
        %602 = vrot.lane.b32.xlu0 %v597, 124
        %v603 = vpop.permute.xlu0 %602
        %vm604 = vcmask 1014784
        %v605 = vsel %vm604, %v601, %v603
        %v607 = vadd.f32 %v591, %v605
        %608 = vset.pattern.permute.xlu0 17
        %609 = vperm.xlu0 %608, %v283
        %v610 = vpop.permute.xlu0 %609
        %v612 = vmul.f32 %v610, %v384
        %v613 = vmul.f32 %v610, %v388
        %616 = vrot.lane.b32.xlu0 %v612, 124
        %v617 = vpop.permute.xlu0 %616
        %618 = vrot.lane.b32.xlu0 %v613, 124
        %v619 = vpop.permute.xlu0 %618
        %v620 = vsel %vm604, %v617, %v619
        %v622 = vadd.f32 %v607, %v620
        %623 = vset.pattern.permute.xlu0 18
        %624 = vperm.xlu0 %623, %v283
        %v625 = vpop.permute.xlu0 %624
        %v627 = vmul.f32 %v625, %v419
        %v628 = vmul.f32 %v625, %v423
        %631 = vrot.lane.b32.xlu0 %v627, 124
        %v632 = vpop.permute.xlu0 %631
        %633 = vrot.lane.b32.xlu0 %v628, 124
        %v634 = vpop.permute.xlu0 %633
        %v635 = vsel %vm604, %v632, %v634
        %v637 = vadd.f32 %v622, %v635
        %638 = vset.pattern.permute.xlu0 19
        %639 = vperm.xlu0 %638, %v283
        %v640 = vpop.permute.xlu0 %639
        %v642 = vmul.f32 %v640, %v454
        %v643 = vmul.f32 %v640, %v458
        %646 = vrot.lane.b32.xlu0 %v642, 124
        %v647 = vpop.permute.xlu0 %646
        %648 = vrot.lane.b32.xlu0 %v643, 124
        %v649 = vpop.permute.xlu0 %648
        %v650 = vsel %vm604, %v647, %v649
        %v652 = vadd.f32 %v637, %v650
        %vm653 = vcmask 1043456
        %v654 = vsel %vm653, %v652, 0.0
        %655 = vadd.xlane.f32.xlu0 %v654
        %v656 = vpop.xlane.xlu0 %655
        %v657 = vrcp.pop 128.0
        %v658 = vmul.f32 %v656, %v657
        %v659 = vld [vmem:[%s2] sm:$0xf]
        %v660 = vmul.f32 %v659, %v658
        %vm661 = vcmask 257024
        %v662 = vsel %vm661, %v660, 0.0
        %v663 = vrot.slane %v662, 4
        %v664 = vadd.f32 %v662, %v663
        %v665 = vrot.slane %v664, 2
        %v666 = vadd.f32 %v664, %v665
        %v667 = vrot.slane %v666, 1
        %v668 = vadd.f32 %v666, %v667
        %v669 = vld [vmem:[%s3] sm:$0x1]
        %v670 = vadd.f32 %v668, %v669
        %v671 = vmax.f32 %v670, 0.0
        %v672 = vld [vmem:[%s4] sm:$0xf]
        %v673 = vlaneseq
        %v674 = vshrl.u32 %v673, 7
        %v675 = vsub.s32 0, %v674
        %v676 = vrot.slane %v671, %v675
        %v677 = vmul.f32 %v672, %v676
        %v678 = vsel %vm661, %v677, 0.0
        %679 = vadd.xlane.f32.xlu0 %v678
        %v680 = vpop.xlane.xlu0 %679
        %v681 = vld [vmem:[%s5] sm:$0xf]
        %v682 = vadd.f32 %v680, %v681
        %v683 = vxor.u32 %v682, 2147483648
        %v684 = vmul.f32 %v683, 1.442695
        %v685 = vpow.pop %v684
        %v686 = vadd.f32 %v685, 1.0
        %v687 = vrcp.pop %v686
        %v688 = vmul.f32 1.0, %v687
        %v689 = vld [vmem:[%s238] sm:$0xf]
        %691 = vset.pattern.permute.xlu0 0
        %692 = vperm.xlu0 %691, %v688
        %v693 = vpop.permute.xlu0 %692
        %v695 = vmul.f32 %v652, %v693
        %v696 = vadd.f32 %v689, %v695
        %697 = vst [vmem:[%s266] sm:$0xf] %v696
        %s698 = sand.u32 %s162, 1
        %s699 = scalar_lea.sflag [#allocation5], %s698
        %s700 = sand.u32 %s162, 1
        %s701 = smul.addr %s700, 4
        %s702 = scalar_lea.vmem [#allocation6], %s701
        // Predicated region
        $region49: #{tpu_custom_call.1} parent=43 // pred_check
          %p703 = pneg %p172
        $region50: #{tpu_custom_call.1} parent=43 // pred_check_branch
          %705 = sbr.rel (%p703) target = $region52
        $region51: #{tpu_custom_call.1} parent=43 // pred_region
          %s707 = ssub.s32 64, 64
          %708 = vsyncadd %s699, %s707
          %s709 = smul.addr %s23, 64
          %s710 = scalar_lea.hbm %s6, %s709
          %s712 = sshll.u32 %s702, 4
          %s713 = int_to_ptr.vmem [resolvable:$true] %s712
          %715 = dma.vmem_to_hbm [thread:$0]  %s713, 64, %s710, %s699
        $region52: #{tpu_custom_call.1} parent=43 // pred_fallthru
          _
      $region44: #{tpu_custom_call.1} parent=5 // pred_fallthru
        _
      %p716 = scmp.le.s32.totalorder 2, %s18
      // Predicated region
      $region53: #{tpu_custom_call.1} parent=5 // pred_check
        %p717 = pneg %p716
      $region54: #{tpu_custom_call.1} parent=5 // pred_check_branch
        %719 = sbr.rel (%p717) target = $region56
      $region55: #{tpu_custom_call.1} parent=5 // pred_region
        %s720 = ssub.s32 %s18, 2
        // Predicated region
        $region57: #{tpu_custom_call.1} parent=55 // pred_check
          %p721 = pneg %p178
        $region58: #{tpu_custom_call.1} parent=55 // pred_check_branch
          %723 = sbr.rel (%p721) target = $region60
        $region59: #{tpu_custom_call.1} parent=55 // pred_region
          %s724 = sand.u32 %s163, 1
          %s725 = scalar_lea.sflag [#allocation5], %s724
          %s726 = sand.u32 %s163, 1
          %s727 = smul.addr %s726, 4
          %s728 = scalar_lea.vmem [#allocation6], %s727
          %729 = dma.done %s725, 64
        $region60: #{tpu_custom_call.1} parent=55 // pred_fallthru
          _
      $region56: #{tpu_custom_call.1} parent=5 // pred_fallthru
        _
    $region6: #{tpu_custom_call.1} parent=1 // loop_footer
      %s22 = sadd.s32 1, %s18
    $region7: #{tpu_custom_call.1} parent=1 // loop_footer_branch
      %17 = sbr.rel target = $region3
    $region8: #{tpu_custom_call.1} parent=1 // loop_exit
      _
    %730 = vsyncpa [#allocation4], 1
    %s731 = scalar_lea.sflag [#allocation4], 1
    %732 = vsyncpa %s731, 1
    %733 = vsyncpa [#allocation5], 1
    %s734 = scalar_lea.sflag [#allocation5], 1
    %735 = vsyncpa %s734, 1

</llo_original>
